<compile_context>
chip_gen: v6e
topology: v6e:2x2x1
jax: 0.10.0
libtpu: 0.0.40
codegen_flags: <defaults>
</compile_context>

<pallas_src>
import math

import jax
import jax.numpy as jnp
from jax.experimental import pallas as pl
from jax.experimental.pallas import tpu as pltpu

SEQ_LEN = 512
IN_CH = 64
OUT_DIM = 64


def feature_extractor_kernel(
    x0_ref,            # (TB, 64)   surviving position 0
    x1_ref,            # (TB, 64)   surviving position 256
    w1_ref, b1_ref,    # (64, 16),  (1, 16)
    w2_ref, b2_ref,    # (16, 32),  (1, 32)
    w3_ref, b3_ref,    # (32, 64),  (1, 64)
    w4_ref, b4_ref,    # (64, 128), (1, 128)
    wfc_ref, bfc_ref,  # (256, 64), (1, 64)
    o_ref,             # (TB, 64)
):
    tb = o_ref.shape[0]

    # Stack the two surviving positions along rows: one matmul chain for both.
    v = jnp.concatenate([x0_ref[...], x1_ref[...]], axis=0)            # (2*TB, 64)

    h = jnp.maximum(jnp.dot(v, w1_ref[...],
                            preferred_element_type=jnp.float32) + b1_ref[...], 0.0)
    h = jnp.maximum(jnp.dot(h, w2_ref[...],
                            preferred_element_type=jnp.float32) + b2_ref[...], 0.0)
    h = jnp.maximum(jnp.dot(h, w3_ref[...],
                            preferred_element_type=jnp.float32) + b3_ref[...], 0.0)
    h = jnp.maximum(jnp.dot(h, w4_ref[...],
                            preferred_element_type=jnp.float32) + b4_ref[...], 0.0)
    # h: (2*TB, 128); rows [:TB] are position 0, rows [TB:] are position 256.

    # Fused fc: lane-concat to (TB, 256) and one K=256 matmul against the
    # pre-reordered (256, 64) fc weight (matches torch's channel-major flatten).
    hcat = jnp.concatenate([h[:tb, :], h[tb:, :]], axis=-1)            # (TB, 256)
    o_ref[...] = (jnp.dot(hcat, wfc_ref[...],
                          preferred_element_type=jnp.float32) + bfc_ref[...])


def feature_extractor_forward(x, params, *, block_b=512):
    """x: (B, 512, 64) float32 — same input as the torch module's forward."""
    (w1, b1, w2, b2, w3, b3, w4, b4, wfc, bfc) = params
    B, L, C = x.shape
    assert L == SEQ_LEN and C == IN_CH, "fc(256, 64) implies L=512, C=64"

    # --- wrapper-side prep (layout plumbing, not compute) ---------------------
    # Only positions {0, 256} survive the stride-2 conv/pool cascade.
    x0 = x[:, 0, :]     # (B, 64)
    x1 = x[:, 256, :]   # (B, 64)

    # Conv weights (Cout, Cin, 1) -> (Cin, Cout).
    w1t = w1.reshape(16, 64).T
    w2t = w2.reshape(32, 16).T
    w3t = w3.reshape(64, 32).T
    w4t = w4.reshape(128, 64).T
    # fc weight (64, 256): torch flatten index is c*2 + p (channel-major over
    # (B, 128, 2)).  Reorder so a lane-concat [h_p0 | h_p1] (index p*128 + c)
    # matmuls directly:  wfc_cat[p*128 + c, o] = wfc[o, c*2 + p].
    wfc_cat = jnp.transpose(wfc.reshape(64, 128, 2), (2, 1, 0)).reshape(256, 64)

    # --- batch tiling ---------------------------------------------------------
    if B <= block_b:
        tb = B                       # single block == full array dim (always legal)
        bp = B
    else:
        tb = block_b                 # multiple of 8 (sublane-aligned)
        bp = math.ceil(B / tb) * tb
        pad = bp - B
        if pad:
            x0 = jnp.pad(x0, ((0, pad), (0, 0)))
            x1 = jnp.pad(x1, ((0, pad), (0, 0)))
    grid = (bp // tb,)

    batch_spec = pl.BlockSpec((tb, IN_CH), lambda i: (i, 0))
    out_spec = pl.BlockSpec((tb, OUT_DIM), lambda i: (i, 0))

    def resident(shape):  # weights: constant index_map -> fetched once, stay in VMEM
        return pl.BlockSpec(shape, lambda i: (0, 0))

    in_specs = [
        batch_spec, batch_spec,
        resident((64, 16)), resident((1, 16)),
        resident((16, 32)), resident((1, 32)),
        resident((32, 64)), resident((1, 64)),
        resident((64, 128)), resident((1, 128)),
        resident((256, 64)), resident((1, 64)),
    ]

    chain_flops = 2 * (64 * 16 + 16 * 32 + 32 * 64 + 64 * 128)   # per row
    cost = pl.CostEstimate(
        flops=bp * (2 * chain_flops + 2 * 256 * 64),
        transcendentals=0,
        bytes_accessed=bp * (2 * IN_CH + OUT_DIM) * 4 + 113_856,  # io + weights
    )

    out = pl.pallas_call(
        feature_extractor_kernel,
        out_shape=jax.ShapeDtypeStruct((bp, OUT_DIM), jnp.float32),
        grid_spec=pltpu.PrefetchScalarGridSpec(
            num_scalar_prefetch=0,
            grid=grid,
            in_specs=in_specs,
            out_specs=out_spec,
        ),
        compiler_params=pltpu.CompilerParams(
            dimension_semantics=("parallel",),
        ),
        cost_estimate=cost,
    )(
        x0, x1,
        w1t, b1.reshape(1, -1),
        w2t, b2.reshape(1, -1),
        w3t, b3.reshape(1, -1),
        w4t, b4.reshape(1, -1),
        wfc_cat, bfc.reshape(1, -1),
    )
    return out[:B]


def reference_forward(x, params):
    """Faithful pure-JAX translation of the torch forward (for verification)."""
    (w1, b1, w2, b2, w3, b3, w4, b4, wfc, bfc) = params
    h = jnp.transpose(x, (0, 2, 1))  # x.permute(0, 2, 1) -> (B, C, L)

    def conv_k1_s2(h, w, b):
        h = h[:, :, ::2]  # kernel_size=1, stride=2, padding=0
        w2d = w.reshape(w.shape[0], w.shape[1])
        return jnp.einsum("oi,bil->bol", w2d, h) + b[None, :, None]

    def pool_k1_s2(h):
        return h[:, :, ::2]  # MaxPool1d(kernel_size=1, stride=2)

    h = pool_k1_s2(jnp.maximum(conv_k1_s2(h, w1, b1), 0.0))
    h = pool_k1_s2(jnp.maximum(conv_k1_s2(h, w2, b2), 0.0))
    h = pool_k1_s2(jnp.maximum(conv_k1_s2(h, w3, b3), 0.0))
    h = pool_k1_s2(jnp.maximum(conv_k1_s2(h, w4, b4), 0.0))
    flat = h.reshape(h.shape[0], -1)  # torch Flatten: (B, 128*2) channel-major
    return flat @ wfc.T + bfc


def make_params(key):
    keys = jax.random.split(key, 10)

    def u(k, shape, fan_in):
        bound = 1.0 / float(fan_in) ** 0.5
        return jax.random.uniform(k, shape, jnp.float32, -bound, bound)

    # Shapes exactly as the torch module's __init__ defines them.
    return (
        u(keys[0], (16, 64, 1), 64),   u(keys[1], (16,), 64),     # conv1
        u(keys[2], (32, 16, 1), 16),   u(keys[3], (32,), 16),     # conv2
        u(keys[4], (64, 32, 1), 32),   u(keys[5], (64,), 32),     # conv3
        u(keys[6], (128, 64, 1), 64),  u(keys[7], (128,), 64),    # conv4
        u(keys[8], (64, 256), 256),    u(keys[9], (64,), 256),    # fc
    )


if __name__ == "__main__":
    key = jax.random.PRNGKey(0)
    k_x, k_p = jax.random.split(key)
    x = jax.random.normal(k_x, (2, SEQ_LEN, IN_CH), dtype=jnp.float32)
    params = make_params(k_p)

    out = feature_extractor_forward(x, params)
    out = jax.block_until_ready(out)

    ref = reference_forward(x, params)
    assert out.shape == (2, OUT_DIM), out.shape
    assert jnp.allclose(out, ref, atol=1e-4, rtol=1e-4), "mismatch vs reference"
    print("KERNEL_OK")
</pallas_src>

<mosaic_0001>
module attributes {stable_mosaic.version = 11 : i64} {
  func.func @feature_extractor_kernel(%arg0: i32, %arg1: memref<2x64xf32, #tpu.memory_space<vmem>>, %arg2: memref<2x64xf32, #tpu.memory_space<vmem>>, %arg3: memref<64x16xf32, #tpu.memory_space<vmem>>, %arg4: memref<1x16xf32, #tpu.memory_space<vmem>>, %arg5: memref<16x32xf32, #tpu.memory_space<vmem>>, %arg6: memref<1x32xf32, #tpu.memory_space<vmem>>, %arg7: memref<32x64xf32, #tpu.memory_space<vmem>>, %arg8: memref<1x64xf32, #tpu.memory_space<vmem>>, %arg9: memref<64x128xf32, #tpu.memory_space<vmem>>, %arg10: memref<1x128xf32, #tpu.memory_space<vmem>>, %arg11: memref<256x64xf32, #tpu.memory_space<vmem>>, %arg12: memref<1x64xf32, #tpu.memory_space<vmem>>, %arg13: memref<2x64xf32, #tpu.memory_space<vmem>>) attributes {dimension_semantics = [#tpu.dimension_semantics<parallel>], iteration_bounds = array<i64: 1>, scalar_prefetch = 0 : i64, scratch_operands = 0 : i64, tpu.core_type = #tpu.core_type<tc>, window_params = [{transform_indices = @transform_0, window_bounds = array<i64: 2, 64>}, {transform_indices = @transform_1, window_bounds = array<i64: 2, 64>}, {pipeline_mode = #tpu.pipeline_mode<synchronous>, transform_indices = @transform_2, window_bounds = array<i64: 64, 16>}, {pipeline_mode = #tpu.pipeline_mode<synchronous>, transform_indices = @transform_3, window_bounds = array<i64: 1, 16>}, {pipeline_mode = #tpu.pipeline_mode<synchronous>, transform_indices = @transform_4, window_bounds = array<i64: 16, 32>}, {pipeline_mode = #tpu.pipeline_mode<synchronous>, transform_indices = @transform_5, window_bounds = array<i64: 1, 32>}, {pipeline_mode = #tpu.pipeline_mode<synchronous>, transform_indices = @transform_6, window_bounds = array<i64: 32, 64>}, {pipeline_mode = #tpu.pipeline_mode<synchronous>, transform_indices = @transform_7, window_bounds = array<i64: 1, 64>}, {pipeline_mode = #tpu.pipeline_mode<synchronous>, transform_indices = @transform_8, window_bounds = array<i64: 64, 128>}, {pipeline_mode = #tpu.pipeline_mode<synchronous>, transform_indices = @transform_9, window_bounds = array<i64: 1, 128>}, {pipeline_mode = #tpu.pipeline_mode<synchronous>, transform_indices = @transform_10, window_bounds = array<i64: 256, 64>}, {pipeline_mode = #tpu.pipeline_mode<synchronous>, transform_indices = @transform_11, window_bounds = array<i64: 1, 64>}, {transform_indices = @transform_12, window_bounds = array<i64: 2, 64>}]} {
    %c0 = arith.constant 0 : index
    %c0_0 = arith.constant 0 : index
    %0 = vector.load %arg1[%c0, %c0_0] : memref<2x64xf32, #tpu.memory_space<vmem>>, vector<2x64xf32>
    %c0_1 = arith.constant 0 : index
    %c0_2 = arith.constant 0 : index
    %1 = vector.load %arg2[%c0_1, %c0_2] : memref<2x64xf32, #tpu.memory_space<vmem>>, vector<2x64xf32>
    %2 = tpu.concatenate %0, %1 in 0 : vector<2x64xf32>, vector<2x64xf32> -> vector<4x64xf32>
    %c0_3 = arith.constant 0 : index
    %c0_4 = arith.constant 0 : index
    %3 = vector.load %arg3[%c0_3, %c0_4] : memref<64x16xf32, #tpu.memory_space<vmem>>, vector<64x16xf32>
    %cst = arith.constant dense<0.000000e+00> : vector<4x16xf32>
    %4 = tpu.matmul %2, %3, %cst {dimension_numbers = #tpu.dot_dimension_numbers<[1], [0], [0], [1], [0, 0, 1, 1], [], []>} : vector<4x64xf32>, vector<64x16xf32>, vector<4x16xf32> -> vector<4x16xf32>
    %c0_5 = arith.constant 0 : index
    %c0_6 = arith.constant 0 : index
    %5 = vector.load %arg4[%c0_5, %c0_6] : memref<1x16xf32, #tpu.memory_space<vmem>>, vector<1x16xf32>
    %6 = vector.broadcast %5 : vector<1x16xf32> to vector<4x16xf32>
    %7 = arith.addf %4, %6 : vector<4x16xf32>
    %cst_7 = arith.constant 0.000000e+00 : f32
    %8 = vector.broadcast %cst_7 : f32 to vector<4x16xf32>
    %9 = arith.maximumf %7, %8 : vector<4x16xf32>
    %c0_8 = arith.constant 0 : index
    %c0_9 = arith.constant 0 : index
    %10 = vector.load %arg5[%c0_8, %c0_9] : memref<16x32xf32, #tpu.memory_space<vmem>>, vector<16x32xf32>
    %cst_10 = arith.constant dense<0.000000e+00> : vector<4x32xf32>
    %11 = tpu.matmul %9, %10, %cst_10 {dimension_numbers = #tpu.dot_dimension_numbers<[1], [0], [0], [1], [0, 0, 1, 1], [], []>} : vector<4x16xf32>, vector<16x32xf32>, vector<4x32xf32> -> vector<4x32xf32>
    %c0_11 = arith.constant 0 : index
    %c0_12 = arith.constant 0 : index
    %12 = vector.load %arg6[%c0_11, %c0_12] : memref<1x32xf32, #tpu.memory_space<vmem>>, vector<1x32xf32>
    %13 = vector.broadcast %12 : vector<1x32xf32> to vector<4x32xf32>
    %14 = arith.addf %11, %13 : vector<4x32xf32>
    %cst_13 = arith.constant 0.000000e+00 : f32
    %15 = vector.broadcast %cst_13 : f32 to vector<4x32xf32>
    %16 = arith.maximumf %14, %15 : vector<4x32xf32>
    %c0_14 = arith.constant 0 : index
    %c0_15 = arith.constant 0 : index
    %17 = vector.load %arg7[%c0_14, %c0_15] : memref<32x64xf32, #tpu.memory_space<vmem>>, vector<32x64xf32>
    %cst_16 = arith.constant dense<0.000000e+00> : vector<4x64xf32>
    %18 = tpu.matmul %16, %17, %cst_16 {dimension_numbers = #tpu.dot_dimension_numbers<[1], [0], [0], [1], [0, 0, 1, 1], [], []>} : vector<4x32xf32>, vector<32x64xf32>, vector<4x64xf32> -> vector<4x64xf32>
    %c0_17 = arith.constant 0 : index
    %c0_18 = arith.constant 0 : index
    %19 = vector.load %arg8[%c0_17, %c0_18] : memref<1x64xf32, #tpu.memory_space<vmem>>, vector<1x64xf32>
    %20 = vector.broadcast %19 : vector<1x64xf32> to vector<4x64xf32>
    %21 = arith.addf %18, %20 : vector<4x64xf32>
    %cst_19 = arith.constant 0.000000e+00 : f32
    %22 = vector.broadcast %cst_19 : f32 to vector<4x64xf32>
    %23 = arith.maximumf %21, %22 : vector<4x64xf32>
    %c0_20 = arith.constant 0 : index
    %c0_21 = arith.constant 0 : index
    %24 = vector.load %arg9[%c0_20, %c0_21] : memref<64x128xf32, #tpu.memory_space<vmem>>, vector<64x128xf32>
    %cst_22 = arith.constant dense<0.000000e+00> : vector<4x128xf32>
    %25 = tpu.matmul %23, %24, %cst_22 {dimension_numbers = #tpu.dot_dimension_numbers<[1], [0], [0], [1], [0, 0, 1, 1], [], []>} : vector<4x64xf32>, vector<64x128xf32>, vector<4x128xf32> -> vector<4x128xf32>
    %c0_23 = arith.constant 0 : index
    %c0_24 = arith.constant 0 : index
    %26 = vector.load %arg10[%c0_23, %c0_24] : memref<1x128xf32, #tpu.memory_space<vmem>>, vector<1x128xf32>
    %27 = vector.broadcast %26 : vector<1x128xf32> to vector<4x128xf32>
    %28 = arith.addf %25, %27 : vector<4x128xf32>
    %cst_25 = arith.constant 0.000000e+00 : f32
    %29 = vector.broadcast %cst_25 : f32 to vector<4x128xf32>
    %30 = arith.maximumf %28, %29 : vector<4x128xf32>
    %31 = vector.extract_strided_slice %30 {offsets = [0, 0], sizes = [2, 128], strides = [1, 1]} : vector<4x128xf32> to vector<2x128xf32>
    %32 = vector.extract_strided_slice %30 {offsets = [2, 0], sizes = [2, 128], strides = [1, 1]} : vector<4x128xf32> to vector<2x128xf32>
    %33 = tpu.concatenate %31, %32 in 1 : vector<2x128xf32>, vector<2x128xf32> -> vector<2x256xf32>
    %c0_26 = arith.constant 0 : index
    %c0_27 = arith.constant 0 : index
    %34 = vector.load %arg11[%c0_26, %c0_27] : memref<256x64xf32, #tpu.memory_space<vmem>>, vector<256x64xf32>
    %cst_28 = arith.constant dense<0.000000e+00> : vector<2x64xf32>
    %35 = tpu.matmul %33, %34, %cst_28 {dimension_numbers = #tpu.dot_dimension_numbers<[1], [0], [0], [1], [0, 0, 1, 1], [], []>} : vector<2x256xf32>, vector<256x64xf32>, vector<2x64xf32> -> vector<2x64xf32>
    %c0_29 = arith.constant 0 : index
    %c0_30 = arith.constant 0 : index
    %36 = vector.load %arg12[%c0_29, %c0_30] : memref<1x64xf32, #tpu.memory_space<vmem>>, vector<1x64xf32>
    %37 = vector.broadcast %36 : vector<1x64xf32> to vector<2x64xf32>
    %38 = arith.addf %35, %37 : vector<2x64xf32>
    %c0_31 = arith.constant 0 : index
    %c0_32 = arith.constant 0 : index
    %39 = vector.load %arg13[%c0_31, %c0_32] : memref<2x64xf32, #tpu.memory_space<vmem>>, vector<2x64xf32>
    tpu.vector_store %arg13[%c0_31, %c0_32], %38 {strides = array<i32>} : memref<2x64xf32, #tpu.memory_space<vmem>>, vector<2x64xf32>,
    return
  }
  func.func @transform_0(%arg0: i32) -> (i32, i32) {
    %c0_i32 = arith.constant 0 : i32
    %c0_i32_0 = arith.constant 0 : i32
    return %arg0, %c0_i32 : i32, i32
  }
  func.func @transform_1(%arg0: i32) -> (i32, i32) {
    %c0_i32 = arith.constant 0 : i32
    %c0_i32_0 = arith.constant 0 : i32
    return %arg0, %c0_i32 : i32, i32
  }
  func.func @transform_2(%arg0: i32) -> (i32, i32) {
    %c0_i32 = arith.constant 0 : i32
    %c0_i32_0 = arith.constant 0 : i32
    %c0_i32_1 = arith.constant 0 : i32
    return %c0_i32, %c0_i32_0 : i32, i32
  }
  func.func @transform_3(%arg0: i32) -> (i32, i32) {
    %c0_i32 = arith.constant 0 : i32
    %c0_i32_0 = arith.constant 0 : i32
    %c0_i32_1 = arith.constant 0 : i32
    return %c0_i32, %c0_i32_0 : i32, i32
  }
  func.func @transform_4(%arg0: i32) -> (i32, i32) {
    %c0_i32 = arith.constant 0 : i32
    %c0_i32_0 = arith.constant 0 : i32
    %c0_i32_1 = arith.constant 0 : i32
    return %c0_i32, %c0_i32_0 : i32, i32
  }
  func.func @transform_5(%arg0: i32) -> (i32, i32) {
    %c0_i32 = arith.constant 0 : i32
    %c0_i32_0 = arith.constant 0 : i32
    %c0_i32_1 = arith.constant 0 : i32
    return %c0_i32, %c0_i32_0 : i32, i32
  }
  func.func @transform_6(%arg0: i32) -> (i32, i32) {
    %c0_i32 = arith.constant 0 : i32
    %c0_i32_0 = arith.constant 0 : i32
    %c0_i32_1 = arith.constant 0 : i32
    return %c0_i32, %c0_i32_0 : i32, i32
  }
  func.func @transform_7(%arg0: i32) -> (i32, i32) {
    %c0_i32 = arith.constant 0 : i32
    %c0_i32_0 = arith.constant 0 : i32
    %c0_i32_1 = arith.constant 0 : i32
    return %c0_i32, %c0_i32_0 : i32, i32
  }
  func.func @transform_8(%arg0: i32) -> (i32, i32) {
    %c0_i32 = arith.constant 0 : i32
    %c0_i32_0 = arith.constant 0 : i32
    %c0_i32_1 = arith.constant 0 : i32
    return %c0_i32, %c0_i32_0 : i32, i32
  }
  func.func @transform_9(%arg0: i32) -> (i32, i32) {
    %c0_i32 = arith.constant 0 : i32
    %c0_i32_0 = arith.constant 0 : i32
    %c0_i32_1 = arith.constant 0 : i32
    return %c0_i32, %c0_i32_0 : i32, i32
  }
  func.func @transform_10(%arg0: i32) -> (i32, i32) {
    %c0_i32 = arith.constant 0 : i32
    %c0_i32_0 = arith.constant 0 : i32
    %c0_i32_1 = arith.constant 0 : i32
    return %c0_i32, %c0_i32_0 : i32, i32
  }
  func.func @transform_11(%arg0: i32) -> (i32, i32) {
    %c0_i32 = arith.constant 0 : i32
    %c0_i32_0 = arith.constant 0 : i32
    %c0_i32_1 = arith.constant 0 : i32
    return %c0_i32, %c0_i32_0 : i32, i32
  }
  func.func @transform_12(%arg0: i32) -> (i32, i32) {
    %c0_i32 = arith.constant 0 : i32
    %c0_i32_0 = arith.constant 0 : i32
    return %arg0, %c0_i32 : i32, i32
  }
}

</mosaic_0001>

<llo_original>
// kernel: tpu_custom_call.1
$region0: #{tpu_custom_call.1}
  #allocation0 [shape = 'u32[]', space=smem, size = 0x4, offset = 0x4, fixed_abs, tag = 'smem constant byte address 0x4 - core index']
  #allocation1 [shape = 'u32[144,128]{1,0:T(1,128)}', space=vmem, size = 0x12000, scoped, tag = 'internal scratch']
  %s0 = inlined_call_operand.vmem [shape: f32[2,64], index: 0, kind: input, shape index: {}]
  %s1 = inlined_call_operand.vmem [shape: f32[2,64], index: 1, kind: input, shape index: {}]
  %s2 = inlined_call_operand.vmem [shape: f32[64,16], index: 2, kind: input, shape index: {}]
  %s3 = inlined_call_operand.vmem [shape: f32[1,16], index: 3, kind: input, shape index: {}]
  %s4 = inlined_call_operand.vmem [shape: f32[16,32], index: 4, kind: input, shape index: {}]
  %s5 = inlined_call_operand.vmem [shape: f32[1,32], index: 5, kind: input, shape index: {}]
  %s6 = inlined_call_operand.vmem [shape: f32[32,64], index: 6, kind: input, shape index: {}]
  %s7 = inlined_call_operand.vmem [shape: f32[1,64], index: 7, kind: input, shape index: {}]
  %s8 = inlined_call_operand.vmem [shape: f32[64,128], index: 8, kind: input, shape index: {}]
  %s9 = inlined_call_operand.vmem [shape: f32[1,128], index: 9, kind: input, shape index: {}]
  %s10 = inlined_call_operand.vmem [shape: f32[256,64], index: 10, kind: input, shape index: {}]
  %s11 = inlined_call_operand.vmem [shape: f32[1,64], index: 11, kind: input, shape index: {}]
  %s12 = inlined_call_operand.hbm [shape: f32[2,64], index: 12, kind: output, shape index: {}]
  %s13 = sld [smem:[#allocation0]]
  $region58: #{tpu_custom_call.1} parent=0
    _
  %s15 = ssub.s32 1, %s13
  %s16 = scalar_select 0, %s15, %s13
  $region1: #{tpu_custom_call.1} parent=0
    #allocation2 [shape = 'u8[1024]{0}', space=vmem, size = 0x400, scoped, tag = 'output window, operand 0, single buffered']
    #allocation3 [shape = 's32[1]{0}', space=sflag, size = 0x4, scoped, tag = 'scoped memory for tpu_custom_call.1']
    %17 = vsyncpa [#allocation3], 0
    // Predicated region
    $region2: #{tpu_custom_call.1} parent=1 // pred_check
      _
    $region3: #{tpu_custom_call.1} parent=1 // pred_check_branch
      %19 = sbr.rel (0) target = $region5
    $region4: #{tpu_custom_call.1} parent=1 // pred_region
      _
    $region5: #{tpu_custom_call.1} parent=1 // pred_fallthru
      _
    // Predicated region
    $region6: #{tpu_custom_call.1} parent=1 // pred_check
      _
    $region7: #{tpu_custom_call.1} parent=1 // pred_check_branch
      %21 = sbr.rel (0) target = $region9
    $region8: #{tpu_custom_call.1} parent=1 // pred_region
      _
    $region9: #{tpu_custom_call.1} parent=1 // pred_fallthru
      _
    // Predicated region
    $region10: #{tpu_custom_call.1} parent=1 // pred_check
      _
    $region11: #{tpu_custom_call.1} parent=1 // pred_check_branch
      %23 = sbr.rel (0) target = $region13
    $region12: #{tpu_custom_call.1} parent=1 // pred_region
      _
    $region13: #{tpu_custom_call.1} parent=1 // pred_fallthru
      _
    // Predicated region
    $region14: #{tpu_custom_call.1} parent=1 // pred_check
      _
    $region15: #{tpu_custom_call.1} parent=1 // pred_check_branch
      %25 = sbr.rel (0) target = $region17
    $region16: #{tpu_custom_call.1} parent=1 // pred_region
      _
    $region17: #{tpu_custom_call.1} parent=1 // pred_fallthru
      _
    // Predicated region
    $region18: #{tpu_custom_call.1} parent=1 // pred_check
      _
    $region19: #{tpu_custom_call.1} parent=1 // pred_check_branch
      %27 = sbr.rel (0) target = $region21
    $region20: #{tpu_custom_call.1} parent=1 // pred_region
      _
    $region21: #{tpu_custom_call.1} parent=1 // pred_fallthru
      _
    // Predicated region
    $region22: #{tpu_custom_call.1} parent=1 // pred_check
      _
    $region23: #{tpu_custom_call.1} parent=1 // pred_check_branch
      %29 = sbr.rel (0) target = $region25
    $region24: #{tpu_custom_call.1} parent=1 // pred_region
      _
    $region25: #{tpu_custom_call.1} parent=1 // pred_fallthru
      _
    // Predicated region
    $region26: #{tpu_custom_call.1} parent=1 // pred_check
      _
    $region27: #{tpu_custom_call.1} parent=1 // pred_check_branch
      %31 = sbr.rel (0) target = $region29
    $region28: #{tpu_custom_call.1} parent=1 // pred_region
      _
    $region29: #{tpu_custom_call.1} parent=1 // pred_fallthru
      _
    // Predicated region
    $region30: #{tpu_custom_call.1} parent=1 // pred_check
      _
    $region31: #{tpu_custom_call.1} parent=1 // pred_check_branch
      %33 = sbr.rel (0) target = $region33
    $region32: #{tpu_custom_call.1} parent=1 // pred_region
      _
    $region33: #{tpu_custom_call.1} parent=1 // pred_fallthru
      _
    // Predicated region
    $region34: #{tpu_custom_call.1} parent=1 // pred_check
      _
    $region35: #{tpu_custom_call.1} parent=1 // pred_check_branch
      %35 = sbr.rel (0) target = $region37
    $region36: #{tpu_custom_call.1} parent=1 // pred_region
      _
    $region37: #{tpu_custom_call.1} parent=1 // pred_fallthru
      _
    // Predicated region
    $region38: #{tpu_custom_call.1} parent=1 // pred_check
      _
    $region39: #{tpu_custom_call.1} parent=1 // pred_check_branch
      %37 = sbr.rel (0) target = $region41
    $region40: #{tpu_custom_call.1} parent=1 // pred_region
      _
    $region41: #{tpu_custom_call.1} parent=1 // pred_fallthru
      _
    // Predicated region
    $region42: #{tpu_custom_call.1} parent=1 // pred_check
      _
    $region43: #{tpu_custom_call.1} parent=1 // pred_check_branch
      %39 = sbr.rel (0) target = $region45
    $region44: #{tpu_custom_call.1} parent=1 // pred_region
      _
    $region45: #{tpu_custom_call.1} parent=1 // pred_fallthru
      _
    // Predicated region
    $region46: #{tpu_custom_call.1} parent=1 // pred_check
      _
    $region47: #{tpu_custom_call.1} parent=1 // pred_check_branch
      %41 = sbr.rel (0) target = $region49
    $region48: #{tpu_custom_call.1} parent=1 // pred_region
      _
    $region49: #{tpu_custom_call.1} parent=1 // pred_fallthru
      _
    %v42 = vld [vmem:[%s0] sm:$0x3]
    %v43 = vld [vmem:[%s1] sm:$0x3]
    %v45 = vrot.slane %v43, 6
    %vm47 = vcmask 1041408
    %v48 = vsel %vm47, %v42, %v45
    %v49 = vld [vmem:[%s2] sm:$0xff]
    %v50 = vld [vmem:[%s2 + $0x8] sm:$0xff]
    %v51 = vld [vmem:[%s2 + $0x10] sm:$0xff]
    %v52 = vld [vmem:[%s2 + $0x18] sm:$0xff]
    %v53 = vld [vmem:[%s2 + $0x20] sm:$0xff]
    %v54 = vld [vmem:[%s2 + $0x28] sm:$0xff]
    %v55 = vld [vmem:[%s2 + $0x30] sm:$0xff]
    %v56 = vld [vmem:[%s2 + $0x38] sm:$0xff]
    %v57 = vld [vmem:[%s3] sm:$0x1]
    %v59 = vlaneseq
    %v60 = vshrl.u32 %v59, 7
    %v61 = vsub.s32 0, %v60
    %v62 = vrot.slane %v57, %v61
    %vm64 = vcmask 523264
    %v66 = vsel %vm64, %v48, 0
    %68 = vmatprep.subr.mxu0 0.0
    %69 = vmatpush1.msra.mxu0 0.0
    %70 = vmatprep.subr.mxu0 0.0
    %71 = vmatpush1.msra.mxu0 0.0
    %72 = vmatprep.subr.mxu0 0.0
    %73 = vmatpush1.msra.mxu0 0.0
    %74 = vmatprep.subr.mxu0 0.0
    %75 = vmatpush1.msra.mxu0 0.0
    %76 = vmatprep.subr.mxu0 0.0
    %77 = vmatpush1.msra.mxu0 0.0
    %78 = vmatprep.subr.mxu0 0.0
    %79 = vmatpush1.msra.mxu0 0.0
    %80 = vmatprep.subr.mxu0 0.0
    %81 = vmatpush1.msra.mxu0 0.0
    %82 = vmatprep.subr.mxu0 0.0
    %83 = vmatpush1.msra.mxu0 0.0
    %84 = vmatprep.subr.mxu0 0.0
    %85 = vmatpush1.msra.mxu0 %v56
    %86 = vmatprep.subr.mxu0 0.0
    %87 = vmatpush1.msra.mxu0 %v55
    %88 = vmatprep.subr.mxu0 0.0
    %89 = vmatpush1.msra.mxu0 %v54
    %90 = vmatprep.subr.mxu0 0.0
    %91 = vmatpush1.msra.mxu0 %v53
    %92 = vmatprep.subr.mxu0 0.0
    %93 = vmatpush1.msra.mxu0 %v52
    %94 = vmatprep.subr.mxu0 0.0
    %95 = vmatpush1.msra.mxu0 %v51
    %96 = vmatprep.subr.mxu0 0.0
    %97 = vmatpush1.msra.mxu0 %v50
    %98 = vmatprep.subr.mxu0 0.0
    %99 = vmatpush1.msra.mxu0 %v49
    %100 = vmatprep.subr.mxu0 0.0
    %101 = vmatpush2.msra.mxu0 0.0
    %102 = vmatprep.subr.mxu0 0.0
    %103 = vmatpush2.msra.mxu0 0.0
    %104 = vmatprep.subr.mxu0 0.0
    %105 = vmatpush2.msra.mxu0 0.0
    %106 = vmatprep.subr.mxu0 0.0
    %107 = vmatpush2.msra.mxu0 0.0
    %108 = vmatprep.subr.mxu0 0.0
    %109 = vmatpush2.msra.mxu0 0.0
    %110 = vmatprep.subr.mxu0 0.0
    %111 = vmatpush2.msra.mxu0 0.0
    %112 = vmatprep.subr.mxu0 0.0
    %113 = vmatpush2.msra.mxu0 0.0
    %114 = vmatprep.subr.mxu0 0.0
    %115 = vmatpush2.msra.mxu0 0.0
    %116 = vmatprep.subr.mxu0 0.0
    %117 = vmatpush2.msra.mxu0 0.0
    %118 = vmatprep.subr.mxu0 0.0
    %119 = vmatpush2.msra.mxu0 0.0
    %120 = vmatprep.subr.mxu0 0.0
    %121 = vmatpush2.msra.mxu0 0.0
    %122 = vmatprep.subr.mxu0 0.0
    %123 = vmatpush2.msra.mxu0 0.0
    %124 = vmatprep.subr.mxu0 0.0
    %125 = vmatpush2.msra.mxu0 0.0
    %126 = vmatprep.subr.mxu0 0.0
    %127 = vmatpush2.msra.mxu0 0.0
    %128 = vmatprep.subr.mxu0 0.0
    %129 = vmatpush2.msra.mxu0 0.0
    %130 = vmatprep.subr.mxu0 0.0
    %131 = vmatpush2.msra.mxu0 0.0
    %132 = vmatprep.mubr.f32.mxu0 0.0
    %133 = vmatmul.mubr.f32.gmra.mxu0 %v66
    %v134 = vpop.f32.mrf.mxu0
    %v135 = vadd.f32 %v62, %v134
    %v136 = vpop.f32.mrf.mxu0
    %137 = vdwg.mxu0
    %v138 = vmax.f32 %v135, 0.0
    %v139 = vld [vmem:[%s4] sm:$0xff]
    %v140 = vld [vmem:[%s4 + $0x8] sm:$0xff]
    %v141 = vld [vmem:[%s5] sm:$0x1]
    %v143 = vlaneseq
    %v144 = vshrl.u32 %v143, 7
    %v145 = vsub.s32 0, %v144
    %v146 = vrot.slane %v141, %v145
    %vm148 = vcmask 130048
    %v150 = vsel %vm148, %v138, 0
    %152 = vmatprep.subr.mxu0 0.0
    %153 = vmatpush1.msra.mxu0 0.0
    %154 = vmatprep.subr.mxu0 0.0
    %155 = vmatpush1.msra.mxu0 0.0
    %156 = vmatprep.subr.mxu0 0.0
    %157 = vmatpush1.msra.mxu0 0.0
    %158 = vmatprep.subr.mxu0 0.0
    %159 = vmatpush1.msra.mxu0 0.0
    %160 = vmatprep.subr.mxu0 0.0
    %161 = vmatpush1.msra.mxu0 0.0
    %162 = vmatprep.subr.mxu0 0.0
    %163 = vmatpush1.msra.mxu0 0.0
    %164 = vmatprep.subr.mxu0 0.0
    %165 = vmatpush1.msra.mxu0 0.0
    %166 = vmatprep.subr.mxu0 0.0
    %167 = vmatpush1.msra.mxu0 0.0
    %168 = vmatprep.subr.mxu0 0.0
    %169 = vmatpush1.msra.mxu0 0.0
    %170 = vmatprep.subr.mxu0 0.0
    %171 = vmatpush1.msra.mxu0 0.0
    %172 = vmatprep.subr.mxu0 0.0
    %173 = vmatpush1.msra.mxu0 0.0
    %174 = vmatprep.subr.mxu0 0.0
    %175 = vmatpush1.msra.mxu0 0.0
    %176 = vmatprep.subr.mxu0 0.0
    %177 = vmatpush1.msra.mxu0 0.0
    %178 = vmatprep.subr.mxu0 0.0
    %179 = vmatpush1.msra.mxu0 0.0
    %180 = vmatprep.subr.mxu0 0.0
    %181 = vmatpush1.msra.mxu0 %v140
    %182 = vmatprep.subr.mxu0 0.0
    %183 = vmatpush1.msra.mxu0 %v139
    %184 = vmatprep.subr.mxu0 0.0
    %185 = vmatpush2.msra.mxu0 0.0
    %186 = vmatprep.subr.mxu0 0.0
    %187 = vmatpush2.msra.mxu0 0.0
    %188 = vmatprep.subr.mxu0 0.0
    %189 = vmatpush2.msra.mxu0 0.0
    %190 = vmatprep.subr.mxu0 0.0
    %191 = vmatpush2.msra.mxu0 0.0
    %192 = vmatprep.subr.mxu0 0.0
    %193 = vmatpush2.msra.mxu0 0.0
    %194 = vmatprep.subr.mxu0 0.0
    %195 = vmatpush2.msra.mxu0 0.0
    %196 = vmatprep.subr.mxu0 0.0
    %197 = vmatpush2.msra.mxu0 0.0
    %198 = vmatprep.subr.mxu0 0.0
    %199 = vmatpush2.msra.mxu0 0.0
    %200 = vmatprep.subr.mxu0 0.0
    %201 = vmatpush2.msra.mxu0 0.0
    %202 = vmatprep.subr.mxu0 0.0
    %203 = vmatpush2.msra.mxu0 0.0
    %204 = vmatprep.subr.mxu0 0.0
    %205 = vmatpush2.msra.mxu0 0.0
    %206 = vmatprep.subr.mxu0 0.0
    %207 = vmatpush2.msra.mxu0 0.0
    %208 = vmatprep.subr.mxu0 0.0
    %209 = vmatpush2.msra.mxu0 0.0
    %210 = vmatprep.subr.mxu0 0.0
    %211 = vmatpush2.msra.mxu0 0.0
    %212 = vmatprep.subr.mxu0 0.0
    %213 = vmatpush2.msra.mxu0 0.0
    %214 = vmatprep.subr.mxu0 0.0
    %215 = vmatpush2.msra.mxu0 0.0
    %216 = vmatprep.mubr.f32.mxu0 0.0
    %217 = vmatmul.mubr.f32.gmra.mxu0 %v150
    %v218 = vpop.f32.mrf.mxu0
    %v219 = vadd.f32 %v146, %v218
    %v220 = vpop.f32.mrf.mxu0
    %221 = vdwg.mxu0
    %v222 = vmax.f32 %v219, 0.0
    %v223 = vld [vmem:[%s6] sm:$0xff]
    %v224 = vld [vmem:[%s6 + $0x8] sm:$0xff]
    %v225 = vld [vmem:[%s6 + $0x10] sm:$0xff]
    %v226 = vld [vmem:[%s6 + $0x18] sm:$0xff]
    %v227 = vld [vmem:[%s7] sm:$0x1]
    %v229 = vlaneseq
    %v230 = vshrl.u32 %v229, 7
    %v231 = vsub.s32 0, %v230
    %v232 = vrot.slane %v227, %v231
    %vm234 = vcmask 261120
    %v236 = vsel %vm234, %v222, 0
    %238 = vmatprep.subr.mxu0 0.0
    %239 = vmatpush1.msra.mxu0 0.0
    %240 = vmatprep.subr.mxu0 0.0
    %241 = vmatpush1.msra.mxu0 0.0
    %242 = vmatprep.subr.mxu0 0.0
    %243 = vmatpush1.msra.mxu0 0.0
    %244 = vmatprep.subr.mxu0 0.0
    %245 = vmatpush1.msra.mxu0 0.0
    %246 = vmatprep.subr.mxu0 0.0
    %247 = vmatpush1.msra.mxu0 0.0
    %248 = vmatprep.subr.mxu0 0.0
    %249 = vmatpush1.msra.mxu0 0.0
    %250 = vmatprep.subr.mxu0 0.0
    %251 = vmatpush1.msra.mxu0 0.0
    %252 = vmatprep.subr.mxu0 0.0
    %253 = vmatpush1.msra.mxu0 0.0
    %254 = vmatprep.subr.mxu0 0.0
    %255 = vmatpush1.msra.mxu0 0.0
    %256 = vmatprep.subr.mxu0 0.0
    %257 = vmatpush1.msra.mxu0 0.0
    %258 = vmatprep.subr.mxu0 0.0
    %259 = vmatpush1.msra.mxu0 0.0
    %260 = vmatprep.subr.mxu0 0.0
    %261 = vmatpush1.msra.mxu0 0.0
    %262 = vmatprep.subr.mxu0 0.0
    %263 = vmatpush1.msra.mxu0 %v226
    %264 = vmatprep.subr.mxu0 0.0
    %265 = vmatpush1.msra.mxu0 %v225
    %266 = vmatprep.subr.mxu0 0.0
    %267 = vmatpush1.msra.mxu0 %v224
    %268 = vmatprep.subr.mxu0 0.0
    %269 = vmatpush1.msra.mxu0 %v223
    %270 = vmatprep.subr.mxu0 0.0
    %271 = vmatpush2.msra.mxu0 0.0
    %272 = vmatprep.subr.mxu0 0.0
    %273 = vmatpush2.msra.mxu0 0.0
    %274 = vmatprep.subr.mxu0 0.0
    %275 = vmatpush2.msra.mxu0 0.0
    %276 = vmatprep.subr.mxu0 0.0
    %277 = vmatpush2.msra.mxu0 0.0
    %278 = vmatprep.subr.mxu0 0.0
    %279 = vmatpush2.msra.mxu0 0.0
    %280 = vmatprep.subr.mxu0 0.0
    %281 = vmatpush2.msra.mxu0 0.0
    %282 = vmatprep.subr.mxu0 0.0
    %283 = vmatpush2.msra.mxu0 0.0
    %284 = vmatprep.subr.mxu0 0.0
    %285 = vmatpush2.msra.mxu0 0.0
    %286 = vmatprep.subr.mxu0 0.0
    %287 = vmatpush2.msra.mxu0 0.0
    %288 = vmatprep.subr.mxu0 0.0
    %289 = vmatpush2.msra.mxu0 0.0
    %290 = vmatprep.subr.mxu0 0.0
    %291 = vmatpush2.msra.mxu0 0.0
    %292 = vmatprep.subr.mxu0 0.0
    %293 = vmatpush2.msra.mxu0 0.0
    %294 = vmatprep.subr.mxu0 0.0
    %295 = vmatpush2.msra.mxu0 0.0
    %296 = vmatprep.subr.mxu0 0.0
    %297 = vmatpush2.msra.mxu0 0.0
    %298 = vmatprep.subr.mxu0 0.0
    %299 = vmatpush2.msra.mxu0 0.0
    %300 = vmatprep.subr.mxu0 0.0
    %301 = vmatpush2.msra.mxu0 0.0
    %302 = vmatprep.mubr.f32.mxu0 0.0
    %303 = vmatmul.mubr.f32.gmra.mxu0 %v236
    %v304 = vpop.f32.mrf.mxu0
    %v305 = vadd.f32 %v232, %v304
    %v306 = vpop.f32.mrf.mxu0
    %307 = vdwg.mxu0
    %v308 = vmax.f32 %v305, 0.0
    %v309 = vld [vmem:[%s8] sm:$0xff]
    %v310 = vld [vmem:[%s8 + $0x8] sm:$0xff]
    %v311 = vld [vmem:[%s8 + $0x10] sm:$0xff]
    %v312 = vld [vmem:[%s8 + $0x18] sm:$0xff]
    %v313 = vld [vmem:[%s8 + $0x20] sm:$0xff]
    %v314 = vld [vmem:[%s8 + $0x28] sm:$0xff]
    %v315 = vld [vmem:[%s8 + $0x30] sm:$0xff]
    %v316 = vld [vmem:[%s8 + $0x38] sm:$0xff]
    %v317 = vld [vmem:[%s9] sm:$0x1]
    %v319 = vlaneseq
    %v320 = vshrl.u32 %v319, 7
    %v321 = vsub.s32 0, %v320
    %v322 = vrot.slane %v317, %v321
    %v325 = vsel %vm64, %v308, 0
    %327 = vmatprep.subr.mxu0 0.0
    %328 = vmatpush1.msra.mxu0 0.0
    %329 = vmatprep.subr.mxu0 0.0
    %330 = vmatpush1.msra.mxu0 0.0
    %331 = vmatprep.subr.mxu0 0.0
    %332 = vmatpush1.msra.mxu0 0.0
    %333 = vmatprep.subr.mxu0 0.0
    %334 = vmatpush1.msra.mxu0 0.0
    %335 = vmatprep.subr.mxu0 0.0
    %336 = vmatpush1.msra.mxu0 0.0
    %337 = vmatprep.subr.mxu0 0.0
    %338 = vmatpush1.msra.mxu0 0.0
    %339 = vmatprep.subr.mxu0 0.0
    %340 = vmatpush1.msra.mxu0 0.0
    %341 = vmatprep.subr.mxu0 0.0
    %342 = vmatpush1.msra.mxu0 0.0
    %343 = vmatprep.subr.mxu0 0.0
    %344 = vmatpush1.msra.mxu0 %v316
    %345 = vmatprep.subr.mxu0 0.0
    %346 = vmatpush1.msra.mxu0 %v315
    %347 = vmatprep.subr.mxu0 0.0
    %348 = vmatpush1.msra.mxu0 %v314
    %349 = vmatprep.subr.mxu0 0.0
    %350 = vmatpush1.msra.mxu0 %v313
    %351 = vmatprep.subr.mxu0 0.0
    %352 = vmatpush1.msra.mxu0 %v312
    %353 = vmatprep.subr.mxu0 0.0
    %354 = vmatpush1.msra.mxu0 %v311
    %355 = vmatprep.subr.mxu0 0.0
    %356 = vmatpush1.msra.mxu0 %v310
    %357 = vmatprep.subr.mxu0 0.0
    %358 = vmatpush1.msra.mxu0 %v309
    %359 = vmatprep.subr.mxu0 0.0
    %360 = vmatpush2.msra.mxu0 0.0
    %361 = vmatprep.subr.mxu0 0.0
    %362 = vmatpush2.msra.mxu0 0.0
    %363 = vmatprep.subr.mxu0 0.0
    %364 = vmatpush2.msra.mxu0 0.0
    %365 = vmatprep.subr.mxu0 0.0
    %366 = vmatpush2.msra.mxu0 0.0
    %367 = vmatprep.subr.mxu0 0.0
    %368 = vmatpush2.msra.mxu0 0.0
    %369 = vmatprep.subr.mxu0 0.0
    %370 = vmatpush2.msra.mxu0 0.0
    %371 = vmatprep.subr.mxu0 0.0
    %372 = vmatpush2.msra.mxu0 0.0
    %373 = vmatprep.subr.mxu0 0.0
    %374 = vmatpush2.msra.mxu0 0.0
    %375 = vmatprep.subr.mxu0 0.0
    %376 = vmatpush2.msra.mxu0 0.0
    %377 = vmatprep.subr.mxu0 0.0
    %378 = vmatpush2.msra.mxu0 0.0
    %379 = vmatprep.subr.mxu0 0.0
    %380 = vmatpush2.msra.mxu0 0.0
    %381 = vmatprep.subr.mxu0 0.0
    %382 = vmatpush2.msra.mxu0 0.0
    %383 = vmatprep.subr.mxu0 0.0
    %384 = vmatpush2.msra.mxu0 0.0
    %385 = vmatprep.subr.mxu0 0.0
    %386 = vmatpush2.msra.mxu0 0.0
    %387 = vmatprep.subr.mxu0 0.0
    %388 = vmatpush2.msra.mxu0 0.0
    %389 = vmatprep.subr.mxu0 0.0
    %390 = vmatpush2.msra.mxu0 0.0
    %391 = vmatprep.mubr.f32.mxu0 0.0
    %392 = vmatmul.mubr.f32.gmra.mxu0 %v325
    %v393 = vpop.f32.mrf.mxu0
    %v394 = vadd.f32 %v322, %v393
    %v395 = vpop.f32.mrf.mxu0
    %396 = vdwg.mxu0
    %v397 = vmax.f32 %v394, 0.0
    %v399 = vrot.slane %v397, 2
    %v401 = vld [vmem:[%s10] sm:$0xff]
    %v402 = vld [vmem:[%s10 + $0x8] sm:$0xff]
    %v403 = vld [vmem:[%s10 + $0x10] sm:$0xff]
    %v404 = vld [vmem:[%s10 + $0x18] sm:$0xff]
    %v405 = vld [vmem:[%s10 + $0x20] sm:$0xff]
    %v406 = vld [vmem:[%s10 + $0x28] sm:$0xff]
    %v407 = vld [vmem:[%s10 + $0x30] sm:$0xff]
    %v408 = vld [vmem:[%s10 + $0x38] sm:$0xff]
    %v409 = vld [vmem:[%s10 + $0x40] sm:$0xff]
    %v410 = vld [vmem:[%s10 + $0x48] sm:$0xff]
    %v411 = vld [vmem:[%s10 + $0x50] sm:$0xff]
    %v412 = vld [vmem:[%s10 + $0x58] sm:$0xff]
    %v413 = vld [vmem:[%s10 + $0x60] sm:$0xff]
    %v414 = vld [vmem:[%s10 + $0x68] sm:$0xff]
    %v415 = vld [vmem:[%s10 + $0x70] sm:$0xff]
    %v416 = vld [vmem:[%s10 + $0x78] sm:$0xff]
    %v417 = vld [vmem:[%s10 + $0x80] sm:$0xff]
    %v418 = vld [vmem:[%s10 + $0x88] sm:$0xff]
    %v419 = vld [vmem:[%s10 + $0x90] sm:$0xff]
    %v420 = vld [vmem:[%s10 + $0x98] sm:$0xff]
    %v421 = vld [vmem:[%s10 + $0xa0] sm:$0xff]
    %v422 = vld [vmem:[%s10 + $0xa8] sm:$0xff]
    %v423 = vld [vmem:[%s10 + $0xb0] sm:$0xff]
    %v424 = vld [vmem:[%s10 + $0xb8] sm:$0xff]
    %v425 = vld [vmem:[%s10 + $0xc0] sm:$0xff]
    %v426 = vld [vmem:[%s10 + $0xc8] sm:$0xff]
    %v427 = vld [vmem:[%s10 + $0xd0] sm:$0xff]
    %v428 = vld [vmem:[%s10 + $0xd8] sm:$0xff]
    %v429 = vld [vmem:[%s10 + $0xe0] sm:$0xff]
    %v430 = vld [vmem:[%s10 + $0xe8] sm:$0xff]
    %v431 = vld [vmem:[%s10 + $0xf0] sm:$0xff]
    %v432 = vld [vmem:[%s10 + $0xf8] sm:$0xff]
    %v433 = vld [vmem:[%s11] sm:$0x1]
    %v435 = vlaneseq
    %v436 = vshrl.u32 %v435, 7
    %v437 = vsub.s32 0, %v436
    %v438 = vrot.slane %v433, %v437
    %440 = vmatprep.subr.mxu0 0.0
    %441 = vmatpush1.msra.mxu0 %v416
    %442 = vmatprep.subr.mxu0 0.0
    %443 = vmatpush1.msra.mxu0 %v415
    %444 = vmatprep.subr.mxu0 0.0
    %445 = vmatpush1.msra.mxu0 %v414
    %446 = vmatprep.subr.mxu0 0.0
    %447 = vmatpush1.msra.mxu0 %v413
    %448 = vmatprep.subr.mxu0 0.0
    %449 = vmatpush1.msra.mxu0 %v412
    %450 = vmatprep.subr.mxu0 0.0
    %451 = vmatpush1.msra.mxu0 %v411
    %452 = vmatprep.subr.mxu0 0.0
    %453 = vmatpush1.msra.mxu0 %v410
    %454 = vmatprep.subr.mxu0 0.0
    %455 = vmatpush1.msra.mxu0 %v409
    %456 = vmatprep.subr.mxu0 0.0
    %457 = vmatpush1.msra.mxu0 %v408
    %458 = vmatprep.subr.mxu0 0.0
    %459 = vmatpush1.msra.mxu0 %v407
    %460 = vmatprep.subr.mxu0 0.0
    %461 = vmatpush1.msra.mxu0 %v406
    %462 = vmatprep.subr.mxu0 0.0
    %463 = vmatpush1.msra.mxu0 %v405
    %464 = vmatprep.subr.mxu0 0.0
    %465 = vmatpush1.msra.mxu0 %v404
    %466 = vmatprep.subr.mxu0 0.0
    %467 = vmatpush1.msra.mxu0 %v403
    %468 = vmatprep.subr.mxu0 0.0
    %469 = vmatpush1.msra.mxu0 %v402
    %470 = vmatprep.subr.mxu0 0.0
    %471 = vmatpush1.msra.mxu0 %v401
    %472 = vmatprep.subr.mxu0 0.0
    %473 = vmatpush2.msra.mxu0 %v432
    %474 = vmatprep.subr.mxu0 0.0
    %475 = vmatpush2.msra.mxu0 %v431
    %476 = vmatprep.subr.mxu0 0.0
    %477 = vmatpush2.msra.mxu0 %v430
    %478 = vmatprep.subr.mxu0 0.0
    %479 = vmatpush2.msra.mxu0 %v429
    %480 = vmatprep.subr.mxu0 0.0
    %481 = vmatpush2.msra.mxu0 %v428
    %482 = vmatprep.subr.mxu0 0.0
    %483 = vmatpush2.msra.mxu0 %v427
    %484 = vmatprep.subr.mxu0 0.0
    %485 = vmatpush2.msra.mxu0 %v426
    %486 = vmatprep.subr.mxu0 0.0
    %487 = vmatpush2.msra.mxu0 %v425
    %488 = vmatprep.subr.mxu0 0.0
    %489 = vmatpush2.msra.mxu0 %v424
    %490 = vmatprep.subr.mxu0 0.0
    %491 = vmatpush2.msra.mxu0 %v423
    %492 = vmatprep.subr.mxu0 0.0
    %493 = vmatpush2.msra.mxu0 %v422
    %494 = vmatprep.subr.mxu0 0.0
    %495 = vmatpush2.msra.mxu0 %v421
    %496 = vmatprep.subr.mxu0 0.0
    %497 = vmatpush2.msra.mxu0 %v420
    %498 = vmatprep.subr.mxu0 0.0
    %499 = vmatpush2.msra.mxu0 %v419
    %500 = vmatprep.subr.mxu0 0.0
    %501 = vmatpush2.msra.mxu0 %v418
    %502 = vmatprep.subr.mxu0 0.0
    %503 = vmatpush2.msra.mxu0 %v417
    %504 = vmatprep.mubr.f32.mxu0 %v399
    %505 = vmatmul.mubr.f32.gmra.mxu0 %v397
    %v506 = vpop.f32.mrf.mxu0
    %v507 = vadd.f32 %v438, %v506
    %v508 = vpop.f32.mrf.mxu0
    %509 = vdwg.mxu0
    %vm510 = vcmask 517120
    %511 = vst.msk [vmem:[#allocation2] sm:$0x3] %vm510, %v507
    // Predicated region
    $region50: #{tpu_custom_call.1} parent=1 // pred_check
      _
    $region51: #{tpu_custom_call.1} parent=1 // pred_check_branch
      %513 = sbr.rel (0) target = $region53
    $region52: #{tpu_custom_call.1} parent=1 // pred_region
      %s515 = ssub.s32 32, 32
      %516 = vsyncadd [#allocation3], %s515
      %s518 = sshll.u32 [#allocation2], 4
      %s519 = int_to_ptr.vmem [resolvable:$true] %s518
      %521 = dma.vmem_to_hbm [thread:$0]  %s519, 32, %s12, [#allocation3]
    $region53: #{tpu_custom_call.1} parent=1 // pred_fallthru
      _
    // Predicated region
    $region54: #{tpu_custom_call.1} parent=1 // pred_check
      _
    $region55: #{tpu_custom_call.1} parent=1 // pred_check_branch
      %523 = sbr.rel (0) target = $region57
    $region56: #{tpu_custom_call.1} parent=1 // pred_region
      %524 = dma.done [#allocation3], 32
    $region57: #{tpu_custom_call.1} parent=1 // pred_fallthru
      _
    %525 = vsyncpa [#allocation3], 1

</llo_original>
